<compile_context>
chip_gen: v6e
topology: v6e:2x2x1
jax: 0.10.0
libtpu: 0.0.40
codegen_flags: <defaults>
</compile_context>

<pallas_src>
import jax
import jax.numpy as jnp
import numpy as np
from jax import lax
from jax.experimental import pallas as pl
from jax.experimental.pallas import tpu as pltpu

LANES = 128
SUBLANES = 8
MAX_BLOCK_ROWS = 8192   # 8192 x 128 x 4B = 4 MiB per input tile per grid step
SUB_ROWS = 512          # in-kernel sub-chunk size (bounds VMEM intermediates)


def _round_up(x, m):
    return (x + m - 1) // m * m


def _make_combined_loss_kernel(w_l1, w_mse, sub_rows, num_sub):
    """Build the kernel with weights baked in as Python (literal) constants."""
    w_l1 = float(w_l1)
    w_mse = float(w_mse)

    def chunk_partial(p, t):
        d = p.astype(jnp.float32) - t.astype(jnp.float32)
        ad = jnp.abs(d)
        # w1*|d| + w2*d^2  ==  |d| * (w1 + w2*|d|)   (one VPU op saved)
        contrib = ad * (w_l1 + w_mse * ad)
        # Fold (rows, 128) -> (8, 128): groups of 8 rows match the native
        # (8, 128) f32 tile, so this lowers to elementwise vreg adds.
        return contrib.reshape(-1, SUBLANES, LANES).sum(axis=0)

    def kernel(pred_ref, target_ref, out_ref):
        # pred_ref/target_ref : VMEM (block_rows, LANES) tiles
        # out_ref             : VMEM (8, 128) f32 partial sums; resident across
        #                       the inner ("arbitrary") grid axis.
        step = pl.program_id(1)

        @pl.when(step == 0)
        def _init():
            out_ref[...] = jnp.zeros_like(out_ref)

        if num_sub == 1:
            out_ref[...] += chunk_partial(pred_ref[...], target_ref[...])
        else:
            def body(k, carry):
                off = pl.multiple_of(k * sub_rows, sub_rows)
                p = pred_ref[pl.ds(off, sub_rows), :]
                t = target_ref[pl.ds(off, sub_rows), :]
                out_ref[...] += chunk_partial(p, t)
                return carry

            lax.fori_loop(0, num_sub, body, 0)

    return kernel


def combined_loss(pred, target, weights=(1.0, 0.25)):
    """Pallas implementation of CombinedLoss([L1Loss, MSELoss], weights).

    pred, target: arrays of identical shape (e.g. NCHW), f32 or bf16.
    Returns a scalar float32 (matches the 0-dim tensor PyTorch returns).
    """
    assert pred.shape == target.shape
    total = int(np.prod(pred.shape))

    rows = -(-total // LANES)                              # ceil-div
    block_rows = min(MAX_BLOCK_ROWS, _round_up(rows, SUBLANES))
    num_blocks = -(-rows // block_rows)

    # v7x has 2 TensorCores per chip: shard the block sweep across the outer
    # "parallel" grid axis. Neutral on v5e/v6e (single TC).
    num_splits = 2 if num_blocks >= 2 else 1
    num_blocks = _round_up(num_blocks, num_splits)
    steps = num_blocks // num_splits

    padded_rows = num_blocks * block_rows
    padded_total = padded_rows * LANES

    def _prep(x):
        flat = x.reshape(-1)
        if padded_total != total:
            # Identical zero pad on both inputs => d == 0 there, contributing
            # nothing to either loss; 1/N below uses the true element count.
            # allow_input_fusion lets XLA fuse this into the pallas_call
            # operands instead of materializing a second HBM copy.
            flat = jnp.pad(flat, (0, padded_total - total))
        return flat.reshape(padded_rows, LANES)

    pred2d = _prep(pred)
    target2d = _prep(target)

    # In-kernel sub-chunking keeps elementwise intermediates small (~256 KiB).
    if block_rows > SUB_ROWS and block_rows % SUB_ROWS == 0:
        sub_rows, num_sub = SUB_ROWS, block_rows // SUB_ROWS
    else:
        sub_rows, num_sub = block_rows, 1

    kernel = _make_combined_loss_kernel(weights[0], weights[1], sub_rows, num_sub)

    itemsize = np.dtype(pred2d.dtype).itemsize
    in_block_bytes = block_rows * LANES * itemsize
    # 2 inputs x 2 pipeline buffers + headroom for in-kernel intermediates.
    vmem_limit = int(min(64 * 1024 * 1024, 4 * in_block_bytes + 16 * 1024 * 1024))

    cost = pl.CostEstimate(
        flops=6 * padded_total,
        transcendentals=0,
        bytes_accessed=2 * padded_total * itemsize
        + num_splits * SUBLANES * LANES * 4,
    )

    in_map = lambda c, i: (c * steps + i, 0)

    partials = pl.pallas_call(
        kernel,
        out_shape=jax.ShapeDtypeStruct((num_splits, SUBLANES, LANES), jnp.float32),
        grid_spec=pltpu.PrefetchScalarGridSpec(
            num_scalar_prefetch=0,
            grid=(num_splits, steps),
            in_specs=[
                pl.BlockSpec((block_rows, LANES), in_map),
                pl.BlockSpec((block_rows, LANES), in_map),
            ],
            out_specs=pl.BlockSpec((None, SUBLANES, LANES), lambda c, i: (c, 0, 0)),
        ),
        compiler_params=pltpu.CompilerParams(
            dimension_semantics=("parallel", "arbitrary"),
            vmem_limit_bytes=vmem_limit,
            allow_input_fusion=[True, True],
        ),
        cost_estimate=cost,
    )(pred2d, target2d)

    # Single cross-lane/sublane reduction + 1/N scaling, once, in the wrapper.
    return jnp.sum(partials) * (1.0 / total)


def combined_loss_ref(pred, target, weights=(1.0, 0.25)):
    d = pred.astype(jnp.float32) - target.astype(jnp.float32)
    l1 = jnp.mean(jnp.abs(d))
    mse = jnp.mean(d * d)
    return weights[0] * l1 + weights[1] * mse


if __name__ == "__main__":
    key = jax.random.PRNGKey(0)

    # Primary small test: NCHW batch=2, channels=4, spatial=16x16 (tile-aligned,
    # single grid step, no padding).
    k1, k2 = jax.random.split(key)
    pred = jax.random.normal(k1, (2, 4, 16, 16), dtype=jnp.float32)
    target = jax.random.normal(k2, (2, 4, 16, 16), dtype=jnp.float32)

    out = jax.block_until_ready(combined_loss(pred, target))
    ref = combined_loss_ref(pred, target)
    np.testing.assert_allclose(np.asarray(out), np.asarray(ref),
                               rtol=1e-4, atol=1e-6)

    # Secondary test: non-tile-aligned shape exercising the (fusible) zero-pad
    # path and the in-kernel sub-chunk loop.
    k3, k4 = jax.random.split(k2)
    pred_b = jax.random.normal(k3, (2, 3, 255, 257), dtype=jnp.float32)
    target_b = jax.random.normal(k4, (2, 3, 255, 257), dtype=jnp.float32)

    out_b = jax.block_until_ready(combined_loss(pred_b, target_b))
    ref_b = combined_loss_ref(pred_b, target_b)
    np.testing.assert_allclose(np.asarray(out_b), np.asarray(ref_b),
                               rtol=1e-4, atol=1e-6)

    print("KERNEL_OK")
</pallas_src>

<mosaic_0001>
module attributes {stable_mosaic.version = 11 : i64} {
  func.func @kernel(%arg0: i32, %arg1: i32, %arg2: memref<16x128xf32, #tpu.memory_space<vmem>>, %arg3: memref<16x128xf32, #tpu.memory_space<vmem>>, %arg4: memref<1x8x128xf32, #tpu.memory_space<vmem>>) attributes {dimension_semantics = [#tpu.dimension_semantics<parallel>, #tpu.dimension_semantics<arbitrary>], iteration_bounds = array<i64: 1, 1>, scalar_prefetch = 0 : i64, scratch_operands = 0 : i64, tpu.core_type = #tpu.core_type<tc>, window_params = [{transform_indices = @transform_0, window_bounds = array<i64: 16, 128>}, {transform_indices = @transform_1, window_bounds = array<i64: 16, 128>}, {transform_indices = @transform_2, window_bounds = array<i64: 1, 8, 128>}]} {
    %c0_i32 = arith.constant 0 : i32
    %0 = arith.cmpi eq, %arg1, %c0_i32 : i32
    %1 = arith.extui %0 : i1 to i32
    %c0_i32_0 = arith.constant 0 : i32
    %2 = arith.cmpi ne, %1, %c0_i32_0 : i32
    scf.if %2 {
      %cst_12 = arith.constant 0.000000e+00 : f32
      %20 = vector.broadcast %cst_12 : f32 to vector<8x128xf32>
      %c0_13 = arith.constant 0 : index
      %c0_14 = arith.constant 0 : index
      %c0_15 = arith.constant 0 : index
      %21 = vector.load %arg4[%c0_13, %c0_14, %c0_15] : memref<1x8x128xf32, #tpu.memory_space<vmem>>, vector<1x8x128xf32>
      %22 = vector.shape_cast %21 : vector<1x8x128xf32> to vector<8x128xf32>
      %23 = vector.shape_cast %20 : vector<8x128xf32> to vector<1x8x128xf32>
      tpu.vector_store %arg4[%c0_13, %c0_14, %c0_15], %23 {strides = array<i32>} : memref<1x8x128xf32, #tpu.memory_space<vmem>>, vector<1x8x128xf32>,
    } else {
    }
    %c0 = arith.constant 0 : index
    %c0_1 = arith.constant 0 : index
    %c0_2 = arith.constant 0 : index
    %3 = vector.load %arg4[%c0, %c0_1, %c0_2] : memref<1x8x128xf32, #tpu.memory_space<vmem>>, vector<1x8x128xf32>
    %4 = vector.shape_cast %3 : vector<1x8x128xf32> to vector<8x128xf32>
    %c0_3 = arith.constant 0 : index
    %c0_4 = arith.constant 0 : index
    %5 = vector.load %arg2[%c0_3, %c0_4] : memref<16x128xf32, #tpu.memory_space<vmem>>, vector<16x128xf32>
    %c0_5 = arith.constant 0 : index
    %c0_6 = arith.constant 0 : index
    %6 = vector.load %arg3[%c0_5, %c0_6] : memref<16x128xf32, #tpu.memory_space<vmem>>, vector<16x128xf32>
    %7 = arith.subf %5, %6 : vector<16x128xf32>
    %8 = math.absf %7 : vector<16x128xf32>
    %cst = arith.constant 2.500000e-01 : f32
    %9 = vector.broadcast %cst : f32 to vector<16x128xf32>
    %10 = arith.mulf %9, %8 : vector<16x128xf32>
    %cst_7 = arith.constant 1.000000e+00 : f32
    %11 = vector.broadcast %cst_7 : f32 to vector<16x128xf32>
    %12 = arith.addf %11, %10 : vector<16x128xf32>
    %13 = arith.mulf %8, %12 : vector<16x128xf32>
    %14 = vector.shape_cast %13 : vector<16x128xf32> to vector<2x8x128xf32>
    %cst_8 = arith.constant dense<0.000000e+00> : vector<8x128xf32>
    %15 = vector.multi_reduction <add>, %14, %cst_8 [0] : vector<2x8x128xf32> to vector<8x128xf32>
    %16 = arith.addf %4, %15 : vector<8x128xf32>
    %c0_9 = arith.constant 0 : index
    %c0_10 = arith.constant 0 : index
    %c0_11 = arith.constant 0 : index
    %17 = vector.load %arg4[%c0_9, %c0_10, %c0_11] : memref<1x8x128xf32, #tpu.memory_space<vmem>>, vector<1x8x128xf32>
    %18 = vector.shape_cast %17 : vector<1x8x128xf32> to vector<8x128xf32>
    %19 = vector.shape_cast %16 : vector<8x128xf32> to vector<1x8x128xf32>
    tpu.vector_store %arg4[%c0_9, %c0_10, %c0_11], %19 {strides = array<i32>} : memref<1x8x128xf32, #tpu.memory_space<vmem>>, vector<1x8x128xf32>,
    return
  }
  func.func @transform_0(%arg0: i32, %arg1: i32) -> (i32, i32) {
    %c1_i32 = arith.constant 1 : i32
    %0 = arith.muli %arg0, %c1_i32 : i32
    %1 = arith.addi %0, %arg1 : i32
    %c0_i32 = arith.constant 0 : i32
    %c0_i32_0 = arith.constant 0 : i32
    return %1, %c0_i32 : i32, i32
  }
  func.func @transform_1(%arg0: i32, %arg1: i32) -> (i32, i32) {
    %c1_i32 = arith.constant 1 : i32
    %0 = arith.muli %arg0, %c1_i32 : i32
    %1 = arith.addi %0, %arg1 : i32
    %c0_i32 = arith.constant 0 : i32
    %c0_i32_0 = arith.constant 0 : i32
    return %1, %c0_i32 : i32, i32
  }
  func.func @transform_2(%arg0: i32, %arg1: i32) -> (i32, i32, i32) {
    %c0_i32 = arith.constant 0 : i32
    %c0_i32_0 = arith.constant 0 : i32
    %c0_i32_1 = arith.constant 0 : i32
    return %arg0, %c0_i32, %c0_i32_0 : i32, i32, i32
  }
}

</mosaic_0001>

<llo_original>
// kernel: tpu_custom_call.1
$region0: #{tpu_custom_call.1}
  #allocation0 [shape = 'u32[]', space=smem, size = 0x4, offset = 0x4, fixed_abs, tag = 'smem constant byte address 0x4 - core index']
  #allocation1 [shape = 'u32[144,128]{1,0:T(1,128)}', space=vmem, size = 0x12000, scoped, tag = 'internal scratch']
  %s0 = inlined_call_operand.hbm [shape: f32[16,128], index: 0, kind: input, shape index: {}]
  %s1 = inlined_call_operand.hbm [shape: f32[16,128], index: 1, kind: input, shape index: {}]
  %s2 = inlined_call_operand.hbm [shape: f32[1,8,128], index: 2, kind: output, shape index: {}]
  %s3 = sld [smem:[#allocation0]]
  $region30: #{tpu_custom_call.1} parent=0
    _
  %s5 = ssub.s32 1, %s3
  %s6 = scalar_select 0, %s5, %s3
  $region1: #{tpu_custom_call.1} parent=0
    #allocation2 [shape = 'u8[8192]{0}', space=vmem, size = 0x2000, scoped, tag = 'input window, operand 0, single buffered']
    #allocation3 [shape = 's32[1]{0}', space=sflag, size = 0x4, scoped, tag = 'scoped memory for tpu_custom_call.1']
    #allocation4 [shape = 's32[1]{0}', space=sflag, size = 0x4, scoped, tag = 'scoped memory for tpu_custom_call.1']
    #allocation5 [shape = 'u8[8192]{0}', space=vmem, size = 0x2000, scoped, tag = 'input window, operand 1, single buffered']
    #allocation6 [shape = 's32[1]{0}', space=sflag, size = 0x4, scoped, tag = 'scoped memory for tpu_custom_call.1']
    #allocation7 [shape = 'u8[4096]{0}', space=vmem, size = 0x1000, scoped, tag = 'output window, operand 0, single buffered']
    %7 = vsyncpa [#allocation3], 0
    %8 = vsyncpa [#allocation6], 0
    %9 = vsyncpa [#allocation4], 0
    // Predicated region
    $region2: #{tpu_custom_call.1} parent=1 // pred_check
      _
    $region3: #{tpu_custom_call.1} parent=1 // pred_check_branch
      %11 = sbr.rel (0) target = $region5
    $region4: #{tpu_custom_call.1} parent=1 // pred_region
      %s12 = sadd.s32 0, 0
      %s13 = smul.u32 2, %s12
      %s15 = ssub.s32 256, 256
      %16 = vsyncadd [#allocation3], %s15
      %s17 = smul.addr %s13, 128
      %s18 = scalar_lea.hbm %s0, %s17
      %s19 = sshll.u32 [#allocation2], 4
      %s20 = int_to_ptr.vmem [resolvable:$true] %s19
      %25 = dma.hbm_to_vmem [thread:$0]  %s18, 256, %s20, [#allocation3], 128, 128, 8
    $region5: #{tpu_custom_call.1} parent=1 // pred_fallthru
      _
    // Predicated region
    $region6: #{tpu_custom_call.1} parent=1 // pred_check
      _
    $region7: #{tpu_custom_call.1} parent=1 // pred_check_branch
      %27 = sbr.rel (0) target = $region9
    $region8: #{tpu_custom_call.1} parent=1 // pred_region
      %s28 = sadd.s32 0, 0
      %s29 = smul.u32 2, %s28
      %s31 = ssub.s32 256, 256
      %32 = vsyncadd [#allocation6], %s31
      %s33 = smul.addr %s29, 128
      %s34 = scalar_lea.hbm %s1, %s33
      %s35 = sshll.u32 [#allocation5], 4
      %s36 = int_to_ptr.vmem [resolvable:$true] %s35
      %41 = dma.hbm_to_vmem [thread:$0]  %s34, 256, %s36, [#allocation6], 128, 128, 8
    $region9: #{tpu_custom_call.1} parent=1 // pred_fallthru
      _
    // Predicated region
    $region10: #{tpu_custom_call.1} parent=1 // pred_check
      _
    $region11: #{tpu_custom_call.1} parent=1 // pred_check_branch
      %43 = sbr.rel (0) target = $region13
    $region12: #{tpu_custom_call.1} parent=1 // pred_region
      %44 = dma.done [#allocation3], 256
    $region13: #{tpu_custom_call.1} parent=1 // pred_fallthru
      _
    // Predicated region
    $region14: #{tpu_custom_call.1} parent=1 // pred_check
      _
    $region15: #{tpu_custom_call.1} parent=1 // pred_check_branch
      %46 = sbr.rel (0) target = $region17
    $region16: #{tpu_custom_call.1} parent=1 // pred_region
      %47 = dma.done [#allocation6], 256
    $region17: #{tpu_custom_call.1} parent=1 // pred_fallthru
      _
    %s48 = sadd.s32 0, 0
    %s49 = smul.u32 2, %s48
    %s50 = sadd.s32 0, 0
    %s51 = smul.u32 2, %s50
    %p52 = scmp.eq.s32.totalorder 0, 0
    // Predicated region
    $region18: #{tpu_custom_call.1} parent=1 // pred_check
      %p53 = pneg %p52
    $region19: #{tpu_custom_call.1} parent=1 // pred_check_branch
      %55 = sbr.rel (%p53) target = $region21
    $region20: #{tpu_custom_call.1} parent=1 // pred_region
      %56 = vst [vmem:[#allocation7] sm:$0xff] 0.0
    $region21: #{tpu_custom_call.1} parent=1 // pred_fallthru
      _
    %v57 = vld [vmem:[#allocation7] sm:$0xff]
    %v58 = vld [vmem:[#allocation2] sm:$0xff]
    %v59 = vld [vmem:[#allocation2 + $0x8] sm:$0xff]
    %v60 = vld [vmem:[#allocation5] sm:$0xff]
    %v61 = vld [vmem:[#allocation5 + $0x8] sm:$0xff]
    %v62 = vsub.f32 %v58, %v60
    %v63 = vsub.f32 %v59, %v61
    %v64 = vand.u32 2147483647, %v62
    %v65 = vand.u32 2147483647, %v63
    %v66 = vmul.f32 %v64, 0.25
    %v67 = vmul.f32 %v65, 0.25
    %v68 = vadd.f32 %v66, 1.0
    %v69 = vadd.f32 %v67, 1.0
    %v70 = vmul.f32 %v64, %v68
    %v71 = vmul.f32 %v65, %v69
    %v72 = vadd.f32 %v70, %v71
    %v73 = vadd.f32 %v57, %v72
    %74 = vst [vmem:[#allocation7] sm:$0xff] %v73
    // Predicated region
    $region22: #{tpu_custom_call.1} parent=1 // pred_check
      _
    $region23: #{tpu_custom_call.1} parent=1 // pred_check_branch
      %76 = sbr.rel (0) target = $region25
    $region24: #{tpu_custom_call.1} parent=1 // pred_region
      %s78 = ssub.s32 128, 128
      %79 = vsyncadd [#allocation4], %s78
      %s81 = sshll.u32 [#allocation7], 4
      %s82 = int_to_ptr.vmem [resolvable:$true] %s81
      %84 = dma.vmem_to_hbm [thread:$0]  %s82, 128, %s2, [#allocation4]
    $region25: #{tpu_custom_call.1} parent=1 // pred_fallthru
      _
    // Predicated region
    $region26: #{tpu_custom_call.1} parent=1 // pred_check
      _
    $region27: #{tpu_custom_call.1} parent=1 // pred_check_branch
      %86 = sbr.rel (0) target = $region29
    $region28: #{tpu_custom_call.1} parent=1 // pred_region
      %87 = dma.done [#allocation4], 128
    $region29: #{tpu_custom_call.1} parent=1 // pred_fallthru
      _
    %88 = vsyncpa [#allocation3], 1
    %89 = vsyncpa [#allocation6], 1
    %90 = vsyncpa [#allocation4], 1

</llo_original>
